<compile_context>
chip_gen: v5e
topology: v5e:2x2
jax: 0.10.0
libtpu: 0.0.40
codegen_flags: <defaults>
</compile_context>

<pallas_src>
import functools

import jax
import jax.numpy as jnp
from jax.experimental import pallas as pl
from jax.experimental.pallas import tpu as pltpu

_LANE = 128
_SINGLE_BLOCK_BYTES = 1 * 1024 * 1024     # params at/below this are reduced in one block
_TARGET_BLOCK_BYTES = 4 * 1024 * 1024     # streaming tile size (double-buffered by Pallas)
_VMEM_LIMIT_BYTES = 32 * 1024 * 1024


def _sublane_multiple(dtype) -> int:
    # dtype-native vreg tile heights: (8,128) f32, (16,128) bf16/f16, (32,128) int8/fp8.
    return {4: 8, 2: 16, 1: 32}.get(jnp.dtype(dtype).itemsize, 8)


def _scalar_tile(val):
    # Place a scalar at [0, 0] of an (8, 128) f32 tile (full-tile, unmasked store).
    r = jax.lax.broadcasted_iota(jnp.int32, (8, _LANE), 0)
    l = jax.lax.broadcasted_iota(jnp.int32, (8, _LANE), 1)
    return jnp.where((r == 0) & (l == 0), val.astype(jnp.float32), jnp.float32(0.0))


# ------------------------------ cross entropy ------------------------------- #

def _ce_kernel(pred_ref, label_ref, out_ref):
    logits = pred_ref[...].astype(jnp.float32)             # (N, C), unpadded
    n, c = logits.shape
    m = jnp.max(logits, axis=-1, keepdims=True)
    lse = jnp.log(jnp.sum(jnp.exp(logits - m), axis=-1, keepdims=True)) + m
    labels = label_ref[...]                                 # (N, 1) int32
    col = jax.lax.broadcasted_iota(jnp.int32, (n, c), 1)
    picked = jnp.sum(jnp.where(col == labels, logits, 0.0), axis=-1, keepdims=True)
    # TODO(synk): no ignore_index / out-of-range label handling (matches the
    # valid-label default usage of nn.CrossEntropyLoss only).
    out_ref[...] = _scalar_tile(jnp.sum(lse - picked) * jnp.float32(1.0 / n))


def _cross_entropy(pred, label):
    # TODO(synk): tile over batch rows (grid over N) for large N / vocab-sized C;
    # a single resident full-array block is optimal at small shapes.
    labels2d = label.astype(jnp.int32).reshape(-1, 1)
    out = pl.pallas_call(
        _ce_kernel,
        out_shape=jax.ShapeDtypeStruct((8, _LANE), jnp.float32),
    )(pred, labels2d)
    return out[0, 0]


# ------------------------- L1 (sum |W|) per parameter ----------------------- #

def _l1_whole_kernel(p_ref, out_ref):
    out_ref[...] = _scalar_tile(jnp.sum(jnp.abs(p_ref[...].astype(jnp.float32))))


def _l1_tiled_kernel(p_ref, out_ref, acc_ref, *, rows, tp):
    ki = pl.program_id(0)
    nk = pl.num_programs(0)

    @pl.when(ki == 0)
    def _init():
        acc_ref[...] = jnp.zeros_like(acc_ref)

    a = jnp.abs(p_ref[...].astype(jnp.float32))             # (tp, C)
    c = a.shape[-1]
    tail = rows % tp                                        # static Python int

    def _accumulate(x):
        # (tp, C) -> (tp//8, 8, C) is a free leading-dim split; the axis-0 sum is
        # pure VPU vreg adds, so accumulator traffic is only (8, C) per step.
        acc_ref[...] += jnp.sum(x.reshape(tp // 8, 8, c), axis=0)

    if tail:
        @pl.when(ki < nk - 1)
        def _full():
            _accumulate(a)

        @pl.when(ki == nk - 1)
        def _partial():
            # The last block overruns the array; out-of-bounds rows are
            # unspecified, so mask them before accumulating.
            row = jax.lax.broadcasted_iota(jnp.int32, a.shape, 0)
            _accumulate(jnp.where(row < tail, a, 0.0))
    else:
        _accumulate(a)

    @pl.when(ki == nk - 1)
    def _fin():
        out_ref[...] = _scalar_tile(jnp.sum(acc_ref[...]))


def _l1_sum(p):
    """sum(|p|) for one parameter, read from HBM exactly once (no repacking copy)."""
    # Copy-free reshape to 2-D (merge leading dims; 0-D/1-D become a single row).
    if p.ndim == 0:
        p2 = p.reshape(1, 1)
    elif p.ndim == 1:
        p2 = p.reshape(1, p.shape[0])
    else:
        p2 = p.reshape(-1, p.shape[-1])
    rows, cols = p2.shape
    itemsize = jnp.dtype(p2.dtype).itemsize
    sub = _sublane_multiple(p2.dtype)

    if rows * cols * itemsize <= _SINGLE_BLOCK_BYTES or rows < 2 * sub:
        # Small parameter: one resident block, one call.
        # TODO(synk): models with hundreds of tiny parameters should fuse these
        # into a single pallas_call (scalar-prefetched offset table) to amortize
        # the per-call launch overhead.
        out = pl.pallas_call(
            _l1_whole_kernel,
            out_shape=jax.ShapeDtypeStruct((8, _LANE), jnp.float32),
        )(p2)
        return out[0, 0]

    # Streaming path: (tp, cols) blocks, ~4 MiB each, double-buffered by Pallas.
    row_bytes = cols * itemsize
    tp = min(_TARGET_BLOCK_BYTES // row_bytes, rows)
    tp = max(sub, (tp // sub) * sub)
    kt = pl.cdiv(rows, tp)
    # TODO(synk): a parameter whose last dim alone is huge (8 * row_bytes over the
    # VMEM budget) would additionally need lane-dim tiling; not needed for typical
    # (rows, hidden) weights.
    # TODO(synk): on v7x (2 TensorCores) add a leading "parallel" grid axis to
    # split the row stream of very large parameters across both cores.
    out = pl.pallas_call(
        functools.partial(_l1_tiled_kernel, rows=rows, tp=tp),
        out_shape=jax.ShapeDtypeStruct((8, _LANE), jnp.float32),
        grid_spec=pltpu.PrefetchScalarGridSpec(
            num_scalar_prefetch=0,
            grid=(kt,),
            in_specs=[pl.BlockSpec((tp, cols), lambda ki: (ki, 0))],
            out_specs=pl.BlockSpec((8, _LANE), lambda ki: (0, 0)),
            scratch_shapes=[pltpu.VMEM((8, cols), jnp.float32)],
        ),
        compiler_params=pltpu.CompilerParams(
            dimension_semantics=("arbitrary",),
            vmem_limit_bytes=_VMEM_LIMIT_BYTES,
        ),
    )(p2)
    return out[0, 0]


# --------------------------------- wrapper ---------------------------------- #

def ce_loss_with_reg(pred, label, params, lambda_nll, lambda_reg):
    """lambda_nll * CrossEntropy(pred, label) + lambda_reg * sum_i sum(|params[i]|)."""
    ce = _cross_entropy(pred, label)
    reg = jnp.float32(0.0)
    for p in params:
        reg = reg + _l1_sum(p)
    return jnp.float32(lambda_nll) * ce + jnp.float32(lambda_reg) * reg


def _reference(pred, label, params, lambda_nll, lambda_reg):
    logp = jax.nn.log_softmax(pred.astype(jnp.float32), axis=-1)
    ce = -jnp.mean(logp[jnp.arange(pred.shape[0]), label])
    reg = sum(jnp.sum(jnp.abs(p.astype(jnp.float32))) for p in params)
    return lambda_nll * ce + lambda_reg * reg


if __name__ == "__main__":
    key = jax.random.PRNGKey(0)
    k_pred, k_lab, k_w1, k_b1, k_w2, k_b2, k_w3 = jax.random.split(key, 7)

    N, C, HID = 8, 32, 16  # batch, num_classes, hidden dim of the synthetic model

    pred = jax.random.normal(k_pred, (N, C), dtype=jnp.float32)
    label = jax.random.randint(k_lab, (N,), 0, C, dtype=jnp.int32)

    # Deterministic synthetic "model" parameters.  The last one is large enough
    # (~4 MiB, rows not a multiple of the tile) to exercise the tiled, masked,
    # double-buffered L1 streaming path; the rest exercise the small-param path.
    params = [
        jax.random.normal(k_w1, (HID, HID), dtype=jnp.float32) * 0.1,   # W1
        jax.random.normal(k_b1, (HID,), dtype=jnp.float32) * 0.1,       # b1
        jax.random.normal(k_w2, (C, HID), dtype=jnp.float32) * 0.1,     # W2
        jax.random.normal(k_b2, (C,), dtype=jnp.float32) * 0.1,         # b2
        jax.random.normal(k_w3, (8320, 128), dtype=jnp.float32) * 0.1,  # big weight
    ]

    lambda_nll, lambda_reg = 1.0, 0.01

    loss = ce_loss_with_reg(pred, label, params, lambda_nll, lambda_reg)
    loss = jax.block_until_ready(loss)

    ref = _reference(pred, label, params, lambda_nll, lambda_reg)
    assert jnp.allclose(loss, ref, rtol=1e-4, atol=1e-4), (loss, ref)

    print("KERNEL_OK")
</pallas_src>

<mosaic_0001>
module attributes {stable_mosaic.version = 11 : i64} {
  func.func @_ce_kernel(%arg0: memref<8x32xf32, #tpu.memory_space<vmem>>, %arg1: memref<8x1xi32, #tpu.memory_space<vmem>>, %arg2: memref<8x128xf32, #tpu.memory_space<vmem>>) attributes {dimension_semantics = [], scalar_prefetch = 0 : i64, scratch_operands = 0 : i64, tpu.core_type = #tpu.core_type<tc>} {
    %c0 = arith.constant 0 : index
    %c0_0 = arith.constant 0 : index
    %0 = vector.load %arg0[%c0, %c0_0] : memref<8x32xf32, #tpu.memory_space<vmem>>, vector<8x32xf32>
    %cst = arith.constant dense<0xFF800000> : vector<8xf32>
    %1 = vector.multi_reduction <maximumf>, %0, %cst [1] : vector<8x32xf32> to vector<8xf32>
    %2 = vector.shape_cast %1 : vector<8xf32> to vector<8x1xf32>
    %3 = vector.broadcast %2 : vector<8x1xf32> to vector<8x32xf32>
    %4 = arith.subf %0, %3 : vector<8x32xf32>
    %5 = math.exp %4 : vector<8x32xf32>
    %cst_1 = arith.constant dense<0.000000e+00> : vector<8xf32>
    %6 = vector.multi_reduction <add>, %5, %cst_1 [1] : vector<8x32xf32> to vector<8xf32>
    %7 = vector.shape_cast %6 : vector<8xf32> to vector<8x1xf32>
    %8 = math.log %7 : vector<8x1xf32>
    %9 = arith.addf %8, %2 : vector<8x1xf32>
    %c0_2 = arith.constant 0 : index
    %c0_3 = arith.constant 0 : index
    %10 = vector.load %arg1[%c0_2, %c0_3] : memref<8x1xi32, #tpu.memory_space<vmem>>, vector<8x1xi32>
    %11 = tpu.iota {dimensions = array<i32: 1>} : vector<8x32xi32>
    %12 = vector.broadcast %10 : vector<8x1xi32> to vector<8x32xi32>
    %13 = arith.cmpi eq, %11, %12 : vector<8x32xi32>
    %cst_4 = arith.constant 0.000000e+00 : f32
    %14 = vector.broadcast %cst_4 : f32 to vector<8x32xf32>
    %15 = arith.select %13, %0, %14 : vector<8x32xi1>, vector<8x32xf32>
    %cst_5 = arith.constant dense<0.000000e+00> : vector<8xf32>
    %16 = vector.multi_reduction <add>, %15, %cst_5 [1] : vector<8x32xf32> to vector<8xf32>
    %17 = vector.shape_cast %16 : vector<8xf32> to vector<8x1xf32>
    %18 = arith.subf %9, %17 : vector<8x1xf32>
    %19 = vector.shape_cast %18 : vector<8x1xf32> to vector<1x8x1xf32>
    %cst_6 = arith.constant dense<0.000000e+00> : vector<1xf32>
    %20 = vector.multi_reduction <add>, %19, %cst_6 [1, 2] : vector<1x8x1xf32> to vector<1xf32>
    %21 = vector.shape_cast %20 : vector<1xf32> to vector<1x1x1xf32>
    %22 = vector.extract %21[0, 0, 0] : f32 from vector<1x1x1xf32>
    %cst_7 = arith.constant 1.250000e-01 : f32
    %23 = arith.mulf %22, %cst_7 : f32
    %24 = tpu.iota {dimensions = array<i32: 0>} : vector<8x128xi32>
    %25 = tpu.iota {dimensions = array<i32: 1>} : vector<8x128xi32>
    %c0_i32 = arith.constant 0 : i32
    %26 = vector.broadcast %c0_i32 : i32 to vector<8x128xi32>
    %27 = arith.cmpi eq, %24, %26 : vector<8x128xi32>
    %c0_i32_8 = arith.constant 0 : i32
    %28 = vector.broadcast %c0_i32_8 : i32 to vector<8x128xi32>
    %29 = arith.cmpi eq, %25, %28 : vector<8x128xi32>
    %30 = arith.andi %27, %29 : vector<8x128xi1>
    %cst_9 = arith.constant 0.000000e+00 : f32
    %31 = vector.broadcast %23 : f32 to vector<8x128xf32>
    %32 = vector.broadcast %cst_9 : f32 to vector<8x128xf32>
    %33 = arith.select %30, %31, %32 : vector<8x128xi1>, vector<8x128xf32>
    %c0_10 = arith.constant 0 : index
    %c0_11 = arith.constant 0 : index
    %34 = vector.load %arg2[%c0_10, %c0_11] : memref<8x128xf32, #tpu.memory_space<vmem>>, vector<8x128xf32>
    tpu.vector_store %arg2[%c0_10, %c0_11], %33 {strides = array<i32>} : memref<8x128xf32, #tpu.memory_space<vmem>>, vector<8x128xf32>,
    return
  }
}

</mosaic_0001>

<llo_original>
// kernel: tpu_custom_call.1
$region0: #{tpu_custom_call.1}
  #allocation0 [shape = 'u32[]', space=smem, size = 0x4, offset = 0x4, fixed_abs, tag = 'smem constant byte address 0x4 - core index']
  #allocation1 [shape = 'u32[72,128]{1,0:T(1,128)}', space=vmem, size = 0x9000, scoped, tag = 'internal scratch']
  %s0 = inlined_call_operand.vmem [shape: f32[8,32], index: 0, kind: input, shape index: {}]
  %s1 = inlined_call_operand.vmem [shape: s32[8,1], index: 1, kind: input, shape index: {}]
  %s2 = inlined_call_operand.hbm [shape: f32[8,128], index: 2, kind: output, shape index: {}]
  %s3 = sld [smem:[#allocation0]]
  $region18: #{tpu_custom_call.1} parent=0
    _
  %s5 = ssub.s32 1, %s3
  %s6 = scalar_select 0, %s5, %s3
  $region1: #{tpu_custom_call.1} parent=0
    #allocation2 [shape = 'u8[4096]{0}', space=vmem, size = 0x1000, scoped, tag = 'output window, operand 0, single buffered']
    #allocation3 [shape = 's32[1]{0}', space=sflag, size = 0x4, scoped, tag = 'scoped memory for tpu_custom_call.1']
    %7 = vsyncpa [#allocation3], 0
    // Predicated region
    $region2: #{tpu_custom_call.1} parent=1 // pred_check
      _
    $region3: #{tpu_custom_call.1} parent=1 // pred_check_branch
      %9 = sbr.rel (0) target = $region5
    $region4: #{tpu_custom_call.1} parent=1 // pred_region
      _
    $region5: #{tpu_custom_call.1} parent=1 // pred_fallthru
      _
    // Predicated region
    $region6: #{tpu_custom_call.1} parent=1 // pred_check
      _
    $region7: #{tpu_custom_call.1} parent=1 // pred_check_branch
      %11 = sbr.rel (0) target = $region9
    $region8: #{tpu_custom_call.1} parent=1 // pred_region
      _
    $region9: #{tpu_custom_call.1} parent=1 // pred_fallthru
      _
    %v12 = vld [vmem:[%s0] sm:$0xff]
    %vm13 = vcmask 261120
    %v14 = vsel %vm13, %v12, -inf
    %15 = vmax.xlane.f32.xlu0 %v14
    %v16 = vpop.xlane.xlu0 %15
    %v17 = vsub.f32 %v12, %v16
    %v18 = vmul.f32 %v17, 1.442695
    %v19 = vpow.pop %v18
    %v20 = vsel %vm13, %v19, 0.0
    %21 = vadd.xlane.f32.xlu0 %v20
    %v22 = vpop.xlane.xlu0 %21
    %v23 = vlog2.pop %v22
    %v24 = vmul.f32 %v23, 0.6931472
    %v25 = vadd.f32 %v24, %v16
    %v26 = vld [vmem:[%s1] sm:$0xff]
    %v27 = vlaneseq
    %v28 = vand.u32 %v27, 127
    %29 = vset.pattern.permute.xlu0 0
    %30 = vperm.xlu0 %29, %v26
    %v31 = vpop.permute.xlu0 %30
    %vm32 = vcmp.eq.s32.totalorder %v28, %v31
    %v33 = vsel %vm32, %v12, 0.0
    %v34 = vsel %vm13, %v33, 0.0
    %35 = vadd.xlane.f32.xlu0 %v34
    %v36 = vpop.xlane.xlu0 %35
    %v37 = vsub.f32 %v25, %v36
    %vm38 = vcmask 7168
    %v39 = vsel %vm38, %v37, 0.0
    %40 = vadd.xlane.f32.xlu0 %v39
    %v41 = vpop.xlane.xlu0 %40
    %v42 = vrot.slane %v41, 4
    %v43 = vadd.f32 %v41, %v42
    %v44 = vrot.slane %v43, 2
    %v45 = vadd.f32 %v43, %v44
    %v46 = vrot.slane %v45, 1
    %v47 = vadd.f32 %v45, %v46
    %s48 = vtos %v47
    %s49 = smul.f32 %s48, 0.125
    %v50 = vlaneseq
    %v51 = vshrl.u32 %v50, 7
    %vm52 = vcmp.eq.s32.totalorder %v51, 0
    %vm53 = vcmp.eq.s32.totalorder %v28, 0
    %vm54 = vmand %vm52, %vm53
    %v55 = vstv %s49
    %v56 = vsel %vm54, %v55, 0.0
    %57 = vst [vmem:[#allocation2] sm:$0xff] %v56
    // Predicated region
    $region10: #{tpu_custom_call.1} parent=1 // pred_check
      _
    $region11: #{tpu_custom_call.1} parent=1 // pred_check_branch
      %59 = sbr.rel (0) target = $region13
    $region12: #{tpu_custom_call.1} parent=1 // pred_region
      %61 = vsyncadd [#allocation3], 0
      %s63 = sshll.u32 [#allocation2], 4
      %s64 = int_to_ptr.vmem [resolvable:$true] %s63
      %s65 = sshll.u32 %s2, 4
      %s66 = int_to_ptr.hbm [resolvable:$true] %s65
      %68 = dma.vmem_to_hbm [thread:$0]  %s64, 128, %s66, [#allocation3]
    $region13: #{tpu_custom_call.1} parent=1 // pred_fallthru
      _
    // Predicated region
    $region14: #{tpu_custom_call.1} parent=1 // pred_check
      _
    $region15: #{tpu_custom_call.1} parent=1 // pred_check_branch
      %70 = sbr.rel (0) target = $region17
    $region16: #{tpu_custom_call.1} parent=1 // pred_region
      %72 = dma.done [#allocation3], 128
    $region17: #{tpu_custom_call.1} parent=1 // pred_fallthru
      _
    %73 = vsyncpa [#allocation3], 1

</llo_original>
